<compile_context>
chip_gen: v5e
topology: v5e:2x2
jax: 0.10.0
libtpu: 0.0.40
codegen_flags: <defaults>
</compile_context>

<pallas_src>
import functools

import jax
import jax.numpy as jnp
from jax.experimental import pallas as pl
from jax.experimental.pallas import tpu as pltpu


def _round_up(x, m):
    return (x + m - 1) // m * m


def _mmd_tile_kernel(ti_ref, tj_ref, nib_ref, row_ref, col_ref,
                     raux_ref, caux_ref, out_ref, *,
                     kernel_mul, kernel_num, tm, tn, use_bf16_gram):
    t = pl.program_id(0)
    i_blk = ti_ref[t]                       # row tile index (SMEM scalar)
    j_blk = tj_ref[t]                       # col tile index, j >= i

    x = row_ref[...]                        # (tm, Dp) f32
    y = col_ref[...]                        # (tn, Dp) f32
    if use_bf16_gram:
        x = x.astype(jnp.bfloat16)
        y = y.astype(jnp.bfloat16)

    # Gram tile on the MXU; contract the feature axis of both operands
    # directly (no explicit transpose through the XLU).
    gram = jax.lax.dot_general(
        x, y, (((1,), (1,)), ((), ())),
        preferred_element_type=jnp.float32)                    # (tm, tn)

    sq_r = raux_ref[:, 0:1]                 # (tm, 1)  ||x_r||^2 (f32)
    s_r = raux_ref[:, 1:2]                  # (tm, 1)  +1 / -1 / 0
    sq_c = caux_ref[0:1, :]                 # (1, tn)  ||x_c||^2 (f32)
    s_c = caux_ref[1:2, :]                  # (1, tn)  +1 / -1 / 0

    # ||x_r - x_c||^2, clamped against cancellation (f32 norm correction even
    # when the Gram tile was computed in bf16).
    l2 = jnp.maximum(sq_r + sq_c - 2.0 * gram, 0.0)

    # Multi-bandwidth Gaussian kernel sum.
    if float(kernel_mul) == 2.0:
        # One exp (single-slot EUP) + repeated squaring (VPU):
        #   exp(-l2/bw_max)^(2^s) == exp(-l2 / (bw_max / 2^s))
        e = jnp.exp(l2 * nib_ref[kernel_num - 1])
        kv = e
        for _ in range(kernel_num - 1):
            e = e * e
            kv = kv + e
    else:
        # General path: scalar -1/bw_t precomputed (no per-element divide).
        kv = jnp.exp(l2 * nib_ref[0])
        for q in range(1, kernel_num):
            kv = kv + jnp.exp(l2 * nib_ref[q])

    # Off-diagonal tile pairs stand for both (i, j) and (j, i): weight 2.
    factor = 2.0 - (i_blk == j_blk).astype(jnp.float32)
    wkv = kv * s_c * (s_r * factor)                            # (tm, tn)

    # Fold the tile into a single lane-dense (8, 128) vreg with plain vreg
    # adds (no cross-lane XLU reduce, no scalar broadcast).  The final sum
    # over the per-step blocks happens in plain JAX.
    lanes = wkv[:, 0:128]
    for c0 in range(128, tn, 128):
        lanes = lanes + wkv[:, c0:c0 + 128]                    # (tm, 128)
    acc = lanes[0:8, :]
    for r0 in range(8, tm, 8):
        acc = acc + lanes[r0:r0 + 8, :]                        # (8, 128)
    out_ref[0] = acc


def mmd_loss(source, target, kernel_mul=2.0, kernel_num=5, fix_sigma=None,
             tile=256, use_bf16_gram=False):
    """MMD loss between source (B, D) and target (B, D). Returns a scalar."""
    assert source.ndim == 2 and source.shape == target.shape
    assert tile % 128 == 0 and kernel_num >= 1
    b, d = source.shape
    n = 2 * b                                     # true rows of `total`

    src = source.astype(jnp.float32)
    tgt = target.astype(jnp.float32)

    # ---- O(nD) prologue (plain JAX glue) ---------------------------------
    # Center (distance-invariant): fixes the catastrophic cancellation in the
    # analytic bandwidth identity and improves in-kernel L2 numerics.
    mu = (jnp.sum(src, axis=0) + jnp.sum(tgt, axis=0)) / n
    src = src - mu
    tgt = tgt - mu

    sq_s = jnp.sum(src * src, axis=1)             # (B,)
    sq_t = jnp.sum(tgt * tgt, axis=1)             # (B,)

    if fix_sigma is not None:
        bandwidth = jnp.float32(fix_sigma)
    else:
        # sum_ij ||x_i - x_j||^2 = 2n*sum_i||x_i||^2 - 2*||sum_i x_i||^2
        col_sum = jnp.sum(src, axis=0) + jnp.sum(tgt, axis=0)   # ~0 (centered)
        l2_sum = (2.0 * n) * (jnp.sum(sq_s) + jnp.sum(sq_t)) \
            - 2.0 * jnp.sum(col_sum * col_sum)
        # NOTE: like the PyTorch module, this is 0 (-> NaN) if source==target.
        bandwidth = l2_sum / float(n * n - n)
    bandwidth = bandwidth / (kernel_mul ** (kernel_num // 2))
    neg_inv_bw = (-1.0 / (bandwidth *
                          (kernel_mul ** jnp.arange(kernel_num,
                                                    dtype=jnp.float32))))
    neg_inv_bw = neg_inv_bw.astype(jnp.float32)                 # (K,) -> SMEM

    # ---- tile geometry ----------------------------------------------------
    d_pad = _round_up(d, 128)
    n128 = _round_up(n, 128)
    tile = min(tile, n128)
    # v7x megacore: prefer >= 2 row tiles (>= 3 triangle steps) so both
    # TensorCores get work on the "parallel" grid axis.
    if tile == n128 and n128 >= 256:
        tile = _round_up(n128 // 2, 128)
    n_pad = _round_up(n, tile)
    nt = n_pad // tile

    # ---- zero-padded centered data + merged (norm, sign) aux operands -----
    total_pad = (jnp.zeros((n_pad, d_pad), jnp.float32)
                 .at[:b, :d].set(src)
                 .at[b:n, :d].set(tgt))
    sq = (jnp.zeros((n_pad,), jnp.float32)
          .at[:b].set(sq_s)
          .at[b:n].set(sq_t))
    sgn = (jnp.zeros((n_pad,), jnp.float32)
           .at[:b].set(1.0)
           .at[b:n].set(-1.0))               # +1: XX/YY, -1: XY/YX, 0: pad
    row_aux = jnp.stack([sq, sgn], axis=1)   # (n_pad, 2) sublane-oriented
    col_aux = jnp.stack([sq, sgn], axis=0)   # (2, n_pad) lane-oriented

    # ---- packed upper-triangle tile-pair schedule (scalar prefetch) -------
    pair_i, pair_j = [], []
    for i in range(nt):
        for j in range(i, nt):
            pair_i.append(i)
            pair_j.append(j)
    n_steps = len(pair_i)                    # nt*(nt+1)//2
    tile_i = jnp.asarray(pair_i, jnp.int32)
    tile_j = jnp.asarray(pair_j, jnp.int32)

    kernel = functools.partial(
        _mmd_tile_kernel,
        kernel_mul=float(kernel_mul), kernel_num=int(kernel_num),
        tm=tile, tn=tile, use_bf16_gram=bool(use_bf16_gram))

    # TODO(synk): for very large D, additionally chunk the feature axis
    # (inner grid axis + (tile, tile) f32 Gram scratch) so the double-
    # buffered (tile, D) operands stay inside v7x's 64 MiB VMEM.
    vmem_est = 2 * 2 * tile * d_pad * 4 + 8 * tile * tile * 4 + (2 << 20)
    vmem_limit = int(min(max(vmem_est, 32 << 20), 64 << 20))

    partials = pl.pallas_call(
        kernel,
        out_shape=jax.ShapeDtypeStruct((n_steps, 8, 128), jnp.float32),
        grid_spec=pltpu.PrefetchScalarGridSpec(
            num_scalar_prefetch=2,                            # tile_i, tile_j
            grid=(n_steps,),
            in_specs=[
                pl.BlockSpec(memory_space=pltpu.MemorySpace.SMEM),   # -1/bw_t
                pl.BlockSpec((tile, d_pad), lambda t, ti, tj: (ti[t], 0)),
                pl.BlockSpec((tile, d_pad), lambda t, ti, tj: (tj[t], 0)),
                pl.BlockSpec((tile, 2), lambda t, ti, tj: (ti[t], 0)),
                pl.BlockSpec((2, tile), lambda t, ti, tj: (0, tj[t])),
            ],
            out_specs=pl.BlockSpec((1, 8, 128), lambda t, ti, tj: (t, 0, 0)),
        ),
        compiler_params=pltpu.CompilerParams(
            dimension_semantics=("parallel",),
            vmem_limit_bytes=vmem_limit),
    )(tile_i, tile_j, neg_inv_bw, total_pad, total_pad, row_aux, col_aux)

    return jnp.sum(partials) / float(b * b)


def _mmd_loss_ref(source, target, kernel_mul=2.0, kernel_num=5,
                  fix_sigma=None):
    """Pure-JAX reference mirroring the PyTorch module (explicit diffs)."""
    b = source.shape[0]
    total = jnp.concatenate([source, target], axis=0).astype(jnp.float32)
    n = total.shape[0]
    diff = total[None, :, :] - total[:, None, :]
    l2 = jnp.sum(diff * diff, axis=2)
    if fix_sigma is not None:
        bandwidth = jnp.float32(fix_sigma)
    else:
        bandwidth = jnp.sum(l2) / (n * n - n)
    bandwidth = bandwidth / (kernel_mul ** (kernel_num // 2))
    kern = sum(jnp.exp(-l2 / (bandwidth * kernel_mul ** i))
               for i in range(kernel_num))
    xx = kern[:b, :b]
    yy = kern[b:, b:]
    xy = kern[:b, b:]
    yx = kern[b:, :b]
    return jnp.mean(xx + yy - xy - yx)


if __name__ == "__main__":
    key = jax.random.PRNGKey(0)
    k1, k2, k3, k4 = jax.random.split(key, 4)

    # Case 1: small shapes consistent with the module's (batch, features)
    # inputs; single-tile triangle, heavy row/feature padding.
    B, D = 8, 32
    source = jax.random.normal(k1, (B, D), dtype=jnp.float32)
    target = jax.random.normal(k2, (B, D), dtype=jnp.float32) + 0.5

    loss = jax.block_until_ready(mmd_loss(source, target))
    ref = jax.block_until_ready(_mmd_loss_ref(source, target))
    assert jnp.allclose(loss, ref, rtol=1e-4, atol=1e-4), (loss, ref)

    # fix_sigma branch.
    loss_fs = jax.block_until_ready(mmd_loss(source, target, fix_sigma=4.0))
    ref_fs = jax.block_until_ready(_mmd_loss_ref(source, target,
                                                 fix_sigma=4.0))
    assert jnp.allclose(loss_fs, ref_fs, rtol=1e-4, atol=1e-4), (loss_fs,
                                                                 ref_fs)

    # Case 2: multi-tile triangle (nt=2 -> 3 steps, diagonal + off-diagonal
    # tiles), source/target boundary inside a tile, row (200->256) and
    # feature (96->128) padding.
    B2, D2 = 100, 96
    source2 = jax.random.normal(k3, (B2, D2), dtype=jnp.float32)
    target2 = jax.random.normal(k4, (B2, D2), dtype=jnp.float32) + 0.3
    loss2 = jax.block_until_ready(mmd_loss(source2, target2, tile=128))
    ref2 = jax.block_until_ready(_mmd_loss_ref(source2, target2))
    assert jnp.allclose(loss2, ref2, rtol=1e-4, atol=1e-4), (loss2, ref2)

    # Case 3: default tile (auto-split to 2 row tiles) + bf16 Gram path on
    # the MXU, checked at a looser tolerance.
    loss3 = jax.block_until_ready(
        mmd_loss(source2, target2, use_bf16_gram=True))
    assert jnp.allclose(loss3, ref2, rtol=2e-2, atol=2e-2), (loss3, ref2)

    print("KERNEL_OK")
</pallas_src>

<mosaic_0001>
module attributes {stable_mosaic.version = 11 : i64} {
  func.func @_mmd_tile_kernel(%arg0: i32, %arg1: memref<1xi32, #tpu.memory_space<smem>>, %arg2: memref<1xi32, #tpu.memory_space<smem>>, %arg3: memref<5xf32, #tpu.memory_space<smem>>, %arg4: memref<128x128xf32, #tpu.memory_space<vmem>>, %arg5: memref<128x128xf32, #tpu.memory_space<vmem>>, %arg6: memref<128x2xf32, #tpu.memory_space<vmem>>, %arg7: memref<2x128xf32, #tpu.memory_space<vmem>>, %arg8: memref<1x8x128xf32, #tpu.memory_space<vmem>>) attributes {dimension_semantics = [#tpu.dimension_semantics<parallel>], iteration_bounds = array<i64: 1>, scalar_prefetch = 2 : i64, scratch_operands = 0 : i64, tpu.core_type = #tpu.core_type<tc>, window_params = [{transform_indices = @transform_0, window_bounds = array<i64: 5>}, {transform_indices = @transform_1, window_bounds = array<i64: 128, 128>}, {transform_indices = @transform_2, window_bounds = array<i64: 128, 128>}, {transform_indices = @transform_3, window_bounds = array<i64: 128, 2>}, {transform_indices = @transform_4, window_bounds = array<i64: 2, 128>}, {transform_indices = @transform_5, window_bounds = array<i64: 1, 8, 128>}]} {
    %0 = arith.index_cast %arg0 : i32 to index
    %1 = memref.load %arg1[%0] : memref<1xi32, #tpu.memory_space<smem>>
    %2 = arith.index_cast %arg0 : i32 to index
    %3 = memref.load %arg2[%2] : memref<1xi32, #tpu.memory_space<smem>>
    %c0 = arith.constant 0 : index
    %c0_0 = arith.constant 0 : index
    %4 = vector.load %arg4[%c0, %c0_0] : memref<128x128xf32, #tpu.memory_space<vmem>>, vector<128x128xf32>
    %c0_1 = arith.constant 0 : index
    %c0_2 = arith.constant 0 : index
    %5 = vector.load %arg5[%c0_1, %c0_2] : memref<128x128xf32, #tpu.memory_space<vmem>>, vector<128x128xf32>
    %cst = arith.constant dense<0.000000e+00> : vector<128x128xf32>
    %6 = tpu.matmul %4, %5, %cst {dimension_numbers = #tpu.dot_dimension_numbers<[1], [1], [0], [0], [0, 0, 1, 0], [], []>} : vector<128x128xf32>, vector<128x128xf32>, vector<128x128xf32> -> vector<128x128xf32>
    %c0_3 = arith.constant 0 : index
    %c0_4 = arith.constant 0 : index
    %7 = vector.load %arg6[%c0_3, %c0_4] : memref<128x2xf32, #tpu.memory_space<vmem>>, vector<128x1xf32>
    %c0_5 = arith.constant 0 : index
    %c1 = arith.constant 1 : index
    %8 = vector.load %arg6[%c0_5, %c1] : memref<128x2xf32, #tpu.memory_space<vmem>>, vector<128x1xf32>
    %c0_6 = arith.constant 0 : index
    %c0_7 = arith.constant 0 : index
    %9 = vector.load %arg7[%c0_6, %c0_7] : memref<2x128xf32, #tpu.memory_space<vmem>>, vector<1x128xf32>
    %c1_8 = arith.constant 1 : index
    %c0_9 = arith.constant 0 : index
    %10 = vector.load %arg7[%c1_8, %c0_9] : memref<2x128xf32, #tpu.memory_space<vmem>>, vector<1x128xf32>
    %11 = vector.broadcast %7 : vector<128x1xf32> to vector<128x128xf32>
    %12 = vector.broadcast %9 : vector<1x128xf32> to vector<128x128xf32>
    %13 = arith.addf %11, %12 : vector<128x128xf32>
    %cst_10 = arith.constant 2.000000e+00 : f32
    %14 = vector.broadcast %cst_10 : f32 to vector<128x128xf32>
    %15 = arith.mulf %14, %6 : vector<128x128xf32>
    %16 = arith.subf %13, %15 : vector<128x128xf32>
    %cst_11 = arith.constant 0.000000e+00 : f32
    %17 = vector.broadcast %cst_11 : f32 to vector<128x128xf32>
    %18 = arith.maximumf %16, %17 : vector<128x128xf32>
    %c4 = arith.constant 4 : index
    %19 = memref.load %arg3[%c4] : memref<5xf32, #tpu.memory_space<smem>>
    %20 = vector.broadcast %19 : f32 to vector<128x128xf32>
    %21 = arith.mulf %18, %20 : vector<128x128xf32>
    %22 = math.exp %21 : vector<128x128xf32>
    %23 = arith.mulf %22, %22 : vector<128x128xf32>
    %24 = arith.addf %22, %23 : vector<128x128xf32>
    %25 = arith.mulf %23, %23 : vector<128x128xf32>
    %26 = arith.addf %24, %25 : vector<128x128xf32>
    %27 = arith.mulf %25, %25 : vector<128x128xf32>
    %28 = arith.addf %26, %27 : vector<128x128xf32>
    %29 = arith.mulf %27, %27 : vector<128x128xf32>
    %30 = arith.addf %28, %29 : vector<128x128xf32>
    %31 = arith.cmpi eq, %1, %3 : i32
    %32 = arith.extui %31 : i1 to i32
    %33 = arith.sitofp %32 : i32 to f32
    %cst_12 = arith.constant 2.000000e+00 : f32
    %34 = arith.subf %cst_12, %33 : f32
    %35 = vector.broadcast %10 : vector<1x128xf32> to vector<128x128xf32>
    %36 = arith.mulf %30, %35 : vector<128x128xf32>
    %37 = vector.broadcast %34 : f32 to vector<128x1xf32>
    %38 = arith.mulf %8, %37 : vector<128x1xf32>
    %39 = vector.broadcast %38 : vector<128x1xf32> to vector<128x128xf32>
    %40 = arith.mulf %36, %39 : vector<128x128xf32>
    %41 = vector.extract_strided_slice %40 {offsets = [0, 0], sizes = [8, 128], strides = [1, 1]} : vector<128x128xf32> to vector<8x128xf32>
    %42 = vector.extract_strided_slice %40 {offsets = [8, 0], sizes = [8, 128], strides = [1, 1]} : vector<128x128xf32> to vector<8x128xf32>
    %43 = arith.addf %41, %42 : vector<8x128xf32>
    %44 = vector.extract_strided_slice %40 {offsets = [16, 0], sizes = [8, 128], strides = [1, 1]} : vector<128x128xf32> to vector<8x128xf32>
    %45 = arith.addf %43, %44 : vector<8x128xf32>
    %46 = vector.extract_strided_slice %40 {offsets = [24, 0], sizes = [8, 128], strides = [1, 1]} : vector<128x128xf32> to vector<8x128xf32>
    %47 = arith.addf %45, %46 : vector<8x128xf32>
    %48 = vector.extract_strided_slice %40 {offsets = [32, 0], sizes = [8, 128], strides = [1, 1]} : vector<128x128xf32> to vector<8x128xf32>
    %49 = arith.addf %47, %48 : vector<8x128xf32>
    %50 = vector.extract_strided_slice %40 {offsets = [40, 0], sizes = [8, 128], strides = [1, 1]} : vector<128x128xf32> to vector<8x128xf32>
    %51 = arith.addf %49, %50 : vector<8x128xf32>
    %52 = vector.extract_strided_slice %40 {offsets = [48, 0], sizes = [8, 128], strides = [1, 1]} : vector<128x128xf32> to vector<8x128xf32>
    %53 = arith.addf %51, %52 : vector<8x128xf32>
    %54 = vector.extract_strided_slice %40 {offsets = [56, 0], sizes = [8, 128], strides = [1, 1]} : vector<128x128xf32> to vector<8x128xf32>
    %55 = arith.addf %53, %54 : vector<8x128xf32>
    %56 = vector.extract_strided_slice %40 {offsets = [64, 0], sizes = [8, 128], strides = [1, 1]} : vector<128x128xf32> to vector<8x128xf32>
    %57 = arith.addf %55, %56 : vector<8x128xf32>
    %58 = vector.extract_strided_slice %40 {offsets = [72, 0], sizes = [8, 128], strides = [1, 1]} : vector<128x128xf32> to vector<8x128xf32>
    %59 = arith.addf %57, %58 : vector<8x128xf32>
    %60 = vector.extract_strided_slice %40 {offsets = [80, 0], sizes = [8, 128], strides = [1, 1]} : vector<128x128xf32> to vector<8x128xf32>
    %61 = arith.addf %59, %60 : vector<8x128xf32>
    %62 = vector.extract_strided_slice %40 {offsets = [88, 0], sizes = [8, 128], strides = [1, 1]} : vector<128x128xf32> to vector<8x128xf32>
    %63 = arith.addf %61, %62 : vector<8x128xf32>
    %64 = vector.extract_strided_slice %40 {offsets = [96, 0], sizes = [8, 128], strides = [1, 1]} : vector<128x128xf32> to vector<8x128xf32>
    %65 = arith.addf %63, %64 : vector<8x128xf32>
    %66 = vector.extract_strided_slice %40 {offsets = [104, 0], sizes = [8, 128], strides = [1, 1]} : vector<128x128xf32> to vector<8x128xf32>
    %67 = arith.addf %65, %66 : vector<8x128xf32>
    %68 = vector.extract_strided_slice %40 {offsets = [112, 0], sizes = [8, 128], strides = [1, 1]} : vector<128x128xf32> to vector<8x128xf32>
    %69 = arith.addf %67, %68 : vector<8x128xf32>
    %70 = vector.extract_strided_slice %40 {offsets = [120, 0], sizes = [8, 128], strides = [1, 1]} : vector<128x128xf32> to vector<8x128xf32>
    %71 = arith.addf %69, %70 : vector<8x128xf32>
    %c0_13 = arith.constant 0 : index
    %c0_14 = arith.constant 0 : index
    %c0_15 = arith.constant 0 : index
    %72 = vector.load %arg8[%c0_13, %c0_14, %c0_15] : memref<1x8x128xf32, #tpu.memory_space<vmem>>, vector<1x8x128xf32>
    %73 = vector.shape_cast %72 : vector<1x8x128xf32> to vector<8x128xf32>
    %74 = vector.shape_cast %71 : vector<8x128xf32> to vector<1x8x128xf32>
    tpu.vector_store %arg8[%c0_13, %c0_14, %c0_15], %74 {strides = array<i32>} : memref<1x8x128xf32, #tpu.memory_space<vmem>>, vector<1x8x128xf32>,
    return
  }
  func.func @transform_0(%arg0: i32, %arg1: memref<1xi32, #tpu.memory_space<smem>>, %arg2: memref<1xi32, #tpu.memory_space<smem>>) -> i32 {
    %c0_i32 = arith.constant 0 : i32
    %c0_i32_0 = arith.constant 0 : i32
    return %c0_i32 : i32
  }
  func.func @transform_1(%arg0: i32, %arg1: memref<1xi32, #tpu.memory_space<smem>>, %arg2: memref<1xi32, #tpu.memory_space<smem>>) -> (i32, i32) {
    %0 = arith.index_cast %arg0 : i32 to index
    %1 = memref.load %arg1[%0] : memref<1xi32, #tpu.memory_space<smem>>
    %c0_i32 = arith.constant 0 : i32
    %c0_i32_0 = arith.constant 0 : i32
    return %1, %c0_i32 : i32, i32
  }
  func.func @transform_2(%arg0: i32, %arg1: memref<1xi32, #tpu.memory_space<smem>>, %arg2: memref<1xi32, #tpu.memory_space<smem>>) -> (i32, i32) {
    %0 = arith.index_cast %arg0 : i32 to index
    %1 = memref.load %arg2[%0] : memref<1xi32, #tpu.memory_space<smem>>
    %c0_i32 = arith.constant 0 : i32
    %c0_i32_0 = arith.constant 0 : i32
    return %1, %c0_i32 : i32, i32
  }
  func.func @transform_3(%arg0: i32, %arg1: memref<1xi32, #tpu.memory_space<smem>>, %arg2: memref<1xi32, #tpu.memory_space<smem>>) -> (i32, i32) {
    %0 = arith.index_cast %arg0 : i32 to index
    %1 = memref.load %arg1[%0] : memref<1xi32, #tpu.memory_space<smem>>
    %c0_i32 = arith.constant 0 : i32
    %c0_i32_0 = arith.constant 0 : i32
    return %1, %c0_i32 : i32, i32
  }
  func.func @transform_4(%arg0: i32, %arg1: memref<1xi32, #tpu.memory_space<smem>>, %arg2: memref<1xi32, #tpu.memory_space<smem>>) -> (i32, i32) {
    %0 = arith.index_cast %arg0 : i32 to index
    %1 = memref.load %arg2[%0] : memref<1xi32, #tpu.memory_space<smem>>
    %c0_i32 = arith.constant 0 : i32
    %c0_i32_0 = arith.constant 0 : i32
    return %c0_i32, %1 : i32, i32
  }
  func.func @transform_5(%arg0: i32, %arg1: memref<1xi32, #tpu.memory_space<smem>>, %arg2: memref<1xi32, #tpu.memory_space<smem>>) -> (i32, i32, i32) {
    %c0_i32 = arith.constant 0 : i32
    %c0_i32_0 = arith.constant 0 : i32
    %c0_i32_1 = arith.constant 0 : i32
    return %arg0, %c0_i32, %c0_i32_0 : i32, i32, i32
  }
}

</mosaic_0001>

<llo_original>
// kernel: tpu_custom_call.1
$region0: #{tpu_custom_call.1}
  #allocation0 [shape = 'u32[]', space=smem, size = 0x4, offset = 0x4, fixed_abs, tag = 'smem constant byte address 0x4 - core index']
  #allocation1 [shape = 'u32[72,128]{1,0:T(1,128)}', space=vmem, size = 0x9000, scoped, tag = 'internal scratch']
  #allocation2 [shape = 's32[1]{0}', space=sflag, size = 0x4, scoped, tag = 'scoped memory for tpu_custom_call.1']
  #allocation3 [shape = 's32[1]{0:T(128)S(6)}', space=smem, size = 0x200, scoped, tag = 'prefetched SMEM operand 0']
  #allocation4 [shape = 's32[1]{0:T(128)S(6)}', space=smem, size = 0x200, scoped, tag = 'prefetched SMEM operand 1']
  %s0 = inlined_call_operand.<no memory space> [shape: s32[1], index: 0, kind: input, shape index: {}]
  %s1 = inlined_call_operand.<no memory space> [shape: s32[1], index: 1, kind: input, shape index: {}]
  %s2 = inlined_call_operand.vmem [shape: f32[5], index: 2, kind: input, shape index: {}]
  %s3 = inlined_call_operand.vmem [shape: f32[128,128], index: 3, kind: input, shape index: {}]
  %s4 = inlined_call_operand.hbm [shape: f32[128,128], index: 4, kind: input, shape index: {}]
  %s5 = inlined_call_operand.vmem [shape: f32[128,2], index: 5, kind: input, shape index: {}]
  %s6 = inlined_call_operand.vmem [shape: f32[2,128], index: 6, kind: input, shape index: {}]
  %s7 = inlined_call_operand.hbm [shape: f32[1,8,128], index: 7, kind: output, shape index: {}]
  %s8 = sld [smem:[#allocation0]]
  $region38: #{tpu_custom_call.1} parent=0
    _
  %s10 = ssub.s32 1, %s8
  %s11 = scalar_select 0, %s10, %s8
  %12 = sst [smem:[#allocation3]] %s0
  %13 = sst [smem:[#allocation4]] %s1
  $region1: #{tpu_custom_call.1} parent=0
    #allocation5 [shape = 'u8[512]{0}', space=smem, size = 0x200, scoped, tag = 'input window, operand 2, single buffered']
    #allocation6 [shape = 's32[1]{0}', space=sflag, size = 0x4, scoped, tag = 'scoped memory for tpu_custom_call.1']
    #allocation7 [shape = 's32[1]{0}', space=sflag, size = 0x4, scoped, tag = 'scoped memory for tpu_custom_call.1']
    #allocation8 [shape = 's32[1]{0}', space=sflag, size = 0x4, scoped, tag = 'scoped memory for tpu_custom_call.1']
    #allocation9 [shape = 'u8[65536]{0}', space=vmem, size = 0x10000, scoped, tag = 'input window, operand 4, single buffered']
    #allocation10 [shape = 'u8[4096]{0}', space=vmem, size = 0x1000, scoped, tag = 'output window, operand 0, single buffered']
    %14 = vsyncpa [#allocation8], 0
    %15 = vsyncpa [#allocation6], 0
    %16 = vsyncpa [#allocation7], 0
    // Predicated region
    $region2: #{tpu_custom_call.1} parent=1 // pred_check
      _
    $region3: #{tpu_custom_call.1} parent=1 // pred_check_branch
      %18 = sbr.rel (0) target = $region5
    $region4: #{tpu_custom_call.1} parent=1 // pred_region
      %20 = vsyncadd [#allocation8], 0
      %s22 = sshll.u32 %s2, 4
      %s23 = int_to_ptr.vmem [resolvable:$true] %s22
      %25 = dma.vmem_to_smem %s23, 16, [#allocation5], [#allocation8]
    $region5: #{tpu_custom_call.1} parent=1 // pred_fallthru
      _
    // Predicated region
    $region6: #{tpu_custom_call.1} parent=1 // pred_check
      _
    $region7: #{tpu_custom_call.1} parent=1 // pred_check_branch
      %27 = sbr.rel (0) target = $region9
    $region8: #{tpu_custom_call.1} parent=1 // pred_region
      %s28 = sld [smem:[#allocation3]]
      %s29 = smul.u32 16, %s28
      %p30 = scmp.lt.s32.totalorder %s29, 15
      %s31 = scalar_select %p30, %s29, 15
      %s32 = smul.addr %s31, 8
      %s33 = scalar_lea.vmem %s3, %s32
      %s34 = sld [smem:[#allocation3]]
      %s35 = smul.u32 16, %s34
    $region9: #{tpu_custom_call.1} parent=1 // pred_fallthru
      _
    // Predicated region
    $region10: #{tpu_custom_call.1} parent=1 // pred_check
      _
    $region11: #{tpu_custom_call.1} parent=1 // pred_check_branch
      %37 = sbr.rel (0) target = $region13
    $region12: #{tpu_custom_call.1} parent=1 // pred_region
      %s38 = sld [smem:[#allocation4]]
      %s39 = smul.u32 16, %s38
      %41 = vsyncadd [#allocation6], 0
      %s42 = smul.addr %s39, 8
      %s43 = scalar_lea.hbm %s4, %s42
      %s44 = sshll.u32 %s43, 4
      %s45 = int_to_ptr.hbm [resolvable:$true] %s44
      %s46 = sshll.u32 [#allocation9], 4
      %s47 = int_to_ptr.vmem [resolvable:$true] %s46
      %52 = dma.hbm_to_vmem [thread:$0]  %s45, 2048, %s47, [#allocation6], 128, 128, 8
    $region13: #{tpu_custom_call.1} parent=1 // pred_fallthru
      _
    // Predicated region
    $region14: #{tpu_custom_call.1} parent=1 // pred_check
      _
    $region15: #{tpu_custom_call.1} parent=1 // pred_check_branch
      %54 = sbr.rel (0) target = $region17
    $region16: #{tpu_custom_call.1} parent=1 // pred_region
      %s55 = sld [smem:[#allocation3]]
      %s56 = smul.u32 16, %s55
      %p57 = scmp.lt.s32.totalorder %s56, 15
      %s58 = scalar_select %p57, %s56, 15
      %s59 = smul.addr %s58, 8
      %s60 = scalar_lea.vmem %s5, %s59
      %s61 = sld [smem:[#allocation3]]
      %s62 = smul.u32 16, %s61
    $region17: #{tpu_custom_call.1} parent=1 // pred_fallthru
      _
    // Predicated region
    $region18: #{tpu_custom_call.1} parent=1 // pred_check
      _
    $region19: #{tpu_custom_call.1} parent=1 // pred_check_branch
      %64 = sbr.rel (0) target = $region21
    $region20: #{tpu_custom_call.1} parent=1 // pred_region
      %s65 = sld [smem:[#allocation4]]
      %p66 = scmp.lt.s32.totalorder %s65, 0
      %s67 = scalar_select %p66, %s65, 0
      %s68 = smul.addr %s67, 2
      %s69 = scalar_lea.vmem %s6, %s68
      %s70 = sld [smem:[#allocation4]]
    $region21: #{tpu_custom_call.1} parent=1 // pred_fallthru
      _
    // Predicated region
    $region22: #{tpu_custom_call.1} parent=1 // pred_check
      _
    $region23: #{tpu_custom_call.1} parent=1 // pred_check_branch
      %72 = sbr.rel (0) target = $region25
    $region24: #{tpu_custom_call.1} parent=1 // pred_region
      %74 = dma.done [#allocation8], 16
    $region25: #{tpu_custom_call.1} parent=1 // pred_fallthru
      _
    // Predicated region
    $region26: #{tpu_custom_call.1} parent=1 // pred_check
      _
    $region27: #{tpu_custom_call.1} parent=1 // pred_check_branch
      %76 = sbr.rel (0) target = $region29
    $region28: #{tpu_custom_call.1} parent=1 // pred_region
      %78 = dma.done [#allocation6], 2048
    $region29: #{tpu_custom_call.1} parent=1 // pred_fallthru
      _
    %79 = sfence
    %s80 = sld [smem:[#allocation3]]
    %s81 = smul.u32 16, %s80
    %p82 = scmp.lt.s32.totalorder %s81, 15
    %s83 = scalar_select %p82, %s81, 15
    %s84 = smul.addr %s83, 8
    %s85 = scalar_lea.vmem %s3, %s84
    %s86 = sld [smem:[#allocation3]]
    %s87 = smul.u32 16, %s86
    %p88 = scmp.lt.s32.totalorder %s87, 15
    %s89 = scalar_select %p88, %s87, 15
    %s90 = smul.addr %s89, 8
    %s91 = scalar_lea.vmem %s5, %s90
    %s92 = sld [smem:[#allocation4]]
    %p93 = scmp.lt.s32.totalorder %s92, 0
    %s94 = scalar_select %p93, %s92, 0
    %s95 = smul.addr %s94, 2
    %s96 = scalar_lea.vmem %s6, %s95
    %s97 = sld [smem:[#allocation3]]
    %s98 = smul.u32 16, %s97
    %p99 = scmp.lt.s32.totalorder %s98, 15
    %s100 = scalar_select %p99, %s98, 15
    %s101 = smul.addr %s100, 8
    %s102 = scalar_lea.vmem %s3, %s101
    %s103 = sld [smem:[#allocation3]]
    %s104 = smul.u32 16, %s103
    %s105 = sld [smem:[#allocation4]]
    %s106 = smul.u32 16, %s105
    %s107 = sld [smem:[#allocation3]]
    %s108 = smul.u32 16, %s107
    %p109 = scmp.lt.s32.totalorder %s108, 15
    %s110 = scalar_select %p109, %s108, 15
    %s111 = smul.addr %s110, 8
    %s112 = scalar_lea.vmem %s5, %s111
    %s113 = sld [smem:[#allocation3]]
    %s114 = smul.u32 16, %s113
    %s115 = sld [smem:[#allocation4]]
    %p116 = scmp.lt.s32.totalorder %s115, 0
    %s117 = scalar_select %p116, %s115, 0
    %s118 = smul.addr %s117, 2
    %s119 = scalar_lea.vmem %s6, %s118
    %s120 = sld [smem:[#allocation4]]
    %s121 = sld [smem:[#allocation3]]
    %s122 = sld [smem:[#allocation4]]
    %v123 = vld [vmem:[%s102] sm:$0xff]
    %v124 = vld [vmem:[%s102 + $0x8] sm:$0xff]
    %v125 = vld [vmem:[%s102 + $0x10] sm:$0xff]
    %v126 = vld [vmem:[%s102 + $0x18] sm:$0xff]
    %v127 = vld [vmem:[%s102 + $0x20] sm:$0xff]
    %v128 = vld [vmem:[%s102 + $0x28] sm:$0xff]
    %v129 = vld [vmem:[%s102 + $0x30] sm:$0xff]
    %v130 = vld [vmem:[%s102 + $0x38] sm:$0xff]
    %v131 = vld [vmem:[%s102 + $0x40] sm:$0xff]
    %v132 = vld [vmem:[%s102 + $0x48] sm:$0xff]
    %v133 = vld [vmem:[%s102 + $0x50] sm:$0xff]
    %v134 = vld [vmem:[%s102 + $0x58] sm:$0xff]
    %v135 = vld [vmem:[%s102 + $0x60] sm:$0xff]
    %v136 = vld [vmem:[%s102 + $0x68] sm:$0xff]
    %v137 = vld [vmem:[%s102 + $0x70] sm:$0xff]
    %v138 = vld [vmem:[%s102 + $0x78] sm:$0xff]
    %v139 = vld [vmem:[#allocation9] sm:$0xff]
    %v140 = vld [vmem:[#allocation9 + $0x8] sm:$0xff]
    %v141 = vld [vmem:[#allocation9 + $0x10] sm:$0xff]
    %v142 = vld [vmem:[#allocation9 + $0x18] sm:$0xff]
    %v143 = vld [vmem:[#allocation9 + $0x20] sm:$0xff]
    %v144 = vld [vmem:[#allocation9 + $0x28] sm:$0xff]
    %v145 = vld [vmem:[#allocation9 + $0x30] sm:$0xff]
    %v146 = vld [vmem:[#allocation9 + $0x38] sm:$0xff]
    %v147 = vld [vmem:[#allocation9 + $0x40] sm:$0xff]
    %v148 = vld [vmem:[#allocation9 + $0x48] sm:$0xff]
    %v149 = vld [vmem:[#allocation9 + $0x50] sm:$0xff]
    %v150 = vld [vmem:[#allocation9 + $0x58] sm:$0xff]
    %v151 = vld [vmem:[#allocation9 + $0x60] sm:$0xff]
    %v152 = vld [vmem:[#allocation9 + $0x68] sm:$0xff]
    %v153 = vld [vmem:[#allocation9 + $0x70] sm:$0xff]
    %v154 = vld [vmem:[#allocation9 + $0x78] sm:$0xff]
    %155 = vmatpush.xpose.msra.mxu0 %v154
    %156 = vmatpush.xpose.msra.mxu0 %v153
    %157 = vmatpush.xpose.msra.mxu0 %v152
    %158 = vmatpush.xpose.msra.mxu0 %v151
    %159 = vmatpush.xpose.msra.mxu0 %v150
    %160 = vmatpush.xpose.msra.mxu0 %v149
    %161 = vmatpush.xpose.msra.mxu0 %v148
    %162 = vmatpush.xpose.msra.mxu0 %v147
    %163 = vmatpush.xpose.msra.mxu0 %v146
    %164 = vmatpush.xpose.msra.mxu0 %v145
    %165 = vmatpush.xpose.msra.mxu0 %v144
    %166 = vmatpush.xpose.msra.mxu0 %v143
    %167 = vmatpush.xpose.msra.mxu0 %v142
    %168 = vmatpush.xpose.msra.mxu0 %v141
    %169 = vmatpush.xpose.msra.mxu0 %v140
    %170 = vmatpush.xpose.msra.mxu0 %v139
    %171 = vmatmul.f32.gmra.mxu0 %v123
    %v172 = vpop.f32.mrf.mxu0
    %v173 = vadd.f32 0.0, %v172
    %174 = vmatmul.f32.gmra.mxu0 %v124
    %v175 = vpop.f32.mrf.mxu0
    %v176 = vadd.f32 0.0, %v175
    %177 = vmatmul.f32.gmra.mxu0 %v125
    %v178 = vpop.f32.mrf.mxu0
    %v179 = vadd.f32 0.0, %v178
    %180 = vmatmul.f32.gmra.mxu0 %v126
    %v181 = vpop.f32.mrf.mxu0
    %v182 = vadd.f32 0.0, %v181
    %183 = vmatmul.f32.gmra.mxu0 %v127
    %v184 = vpop.f32.mrf.mxu0
    %v185 = vadd.f32 0.0, %v184
    %186 = vmatmul.f32.gmra.mxu0 %v128
    %v187 = vpop.f32.mrf.mxu0
    %v188 = vadd.f32 0.0, %v187
    %189 = vmatmul.f32.gmra.mxu0 %v129
    %v190 = vpop.f32.mrf.mxu0
    %v191 = vadd.f32 0.0, %v190
    %192 = vmatmul.f32.gmra.mxu0 %v130
    %v193 = vpop.f32.mrf.mxu0
    %v194 = vadd.f32 0.0, %v193
    %195 = vmatmul.f32.gmra.mxu0 %v131
    %v196 = vpop.f32.mrf.mxu0
    %v197 = vadd.f32 0.0, %v196
    %198 = vmatmul.f32.gmra.mxu0 %v132
    %v199 = vpop.f32.mrf.mxu0
    %v200 = vadd.f32 0.0, %v199
    %201 = vmatmul.f32.gmra.mxu0 %v133
    %v202 = vpop.f32.mrf.mxu0
    %v203 = vadd.f32 0.0, %v202
    %204 = vmatmul.f32.gmra.mxu0 %v134
    %v205 = vpop.f32.mrf.mxu0
    %v206 = vadd.f32 0.0, %v205
    %207 = vmatmul.f32.gmra.mxu0 %v135
    %v208 = vpop.f32.mrf.mxu0
    %v209 = vadd.f32 0.0, %v208
    %210 = vmatmul.f32.gmra.mxu0 %v136
    %v211 = vpop.f32.mrf.mxu0
    %v212 = vadd.f32 0.0, %v211
    %213 = vmatmul.f32.gmra.mxu0 %v137
    %v214 = vpop.f32.mrf.mxu0
    %v215 = vadd.f32 0.0, %v214
    %216 = vmatmul.f32.gmra.mxu0 %v138
    %v217 = vpop.f32.mrf.mxu0
    %v218 = vadd.f32 0.0, %v217
    %219 = vdwg.mxu0
    %v220 = vld [vmem:[%s112] sm:$0xff]
    %v221 = vld [vmem:[%s112 + $0x8] sm:$0xff]
    %v222 = vld [vmem:[%s112 + $0x10] sm:$0xff]
    %v223 = vld [vmem:[%s112 + $0x18] sm:$0xff]
    %v224 = vld [vmem:[%s112 + $0x20] sm:$0xff]
    %v225 = vld [vmem:[%s112 + $0x28] sm:$0xff]
    %v226 = vld [vmem:[%s112 + $0x30] sm:$0xff]
    %v227 = vld [vmem:[%s112 + $0x38] sm:$0xff]
    %v228 = vld [vmem:[%s112 + $0x40] sm:$0xff]
    %v229 = vld [vmem:[%s112 + $0x48] sm:$0xff]
    %v230 = vld [vmem:[%s112 + $0x50] sm:$0xff]
    %v231 = vld [vmem:[%s112 + $0x58] sm:$0xff]
    %v232 = vld [vmem:[%s112 + $0x60] sm:$0xff]
    %v233 = vld [vmem:[%s112 + $0x68] sm:$0xff]
    %v234 = vld [vmem:[%s112 + $0x70] sm:$0xff]
    %v235 = vld [vmem:[%s112 + $0x78] sm:$0xff]
    %v236 = vld [vmem:[%s119] sm:$0x1]
    %v237 = vld [vmem:[%s119 + $0x1] sm:$0x1]
    %239 = vset.pattern.permute.xlu0 0
    %240 = vperm.xlu0 %239, %v220
    %v241 = vpop.permute.xlu0 %240
    %244 = vset.pattern.permute.xlu0 0
    %245 = vperm.xlu0 %244, %v221
    %v246 = vpop.permute.xlu0 %245
    %249 = vset.pattern.permute.xlu0 0
    %250 = vperm.xlu0 %249, %v222
    %v251 = vpop.permute.xlu0 %250
    %254 = vset.pattern.permute.xlu0 0
    %255 = vperm.xlu0 %254, %v223
    %v256 = vpop.permute.xlu0 %255
    %259 = vset.pattern.permute.xlu0 0
    %260 = vperm.xlu0 %259, %v224
    %v261 = vpop.permute.xlu0 %260
    %264 = vset.pattern.permute.xlu0 0
    %265 = vperm.xlu0 %264, %v225
    %v266 = vpop.permute.xlu0 %265
    %269 = vset.pattern.permute.xlu0 0
    %270 = vperm.xlu0 %269, %v226
    %v271 = vpop.permute.xlu0 %270
    %274 = vset.pattern.permute.xlu0 0
    %275 = vperm.xlu0 %274, %v227
    %v276 = vpop.permute.xlu0 %275
    %279 = vset.pattern.permute.xlu0 0
    %280 = vperm.xlu0 %279, %v228
    %v281 = vpop.permute.xlu0 %280
    %284 = vset.pattern.permute.xlu0 0
    %285 = vperm.xlu0 %284, %v229
    %v286 = vpop.permute.xlu0 %285
    %289 = vset.pattern.permute.xlu0 0
    %290 = vperm.xlu0 %289, %v230
    %v291 = vpop.permute.xlu0 %290
    %294 = vset.pattern.permute.xlu0 0
    %295 = vperm.xlu0 %294, %v231
    %v296 = vpop.permute.xlu0 %295
    %299 = vset.pattern.permute.xlu0 0
    %300 = vperm.xlu0 %299, %v232
    %v301 = vpop.permute.xlu0 %300
    %304 = vset.pattern.permute.xlu0 0
    %305 = vperm.xlu0 %304, %v233
    %v306 = vpop.permute.xlu0 %305
    %309 = vset.pattern.permute.xlu0 0
    %310 = vperm.xlu0 %309, %v234
    %v311 = vpop.permute.xlu0 %310
    %314 = vset.pattern.permute.xlu0 0
    %315 = vperm.xlu0 %314, %v235
    %v316 = vpop.permute.xlu0 %315
    %v318 = vperm.slane %v236, 0
    %v319 = vadd.f32 %v241, %v318
    %v320 = vadd.f32 %v246, %v318
    %v321 = vadd.f32 %v251, %v318
    %v322 = vadd.f32 %v256, %v318
    %v323 = vadd.f32 %v261, %v318
    %v324 = vadd.f32 %v266, %v318
    %v325 = vadd.f32 %v271, %v318
    %v326 = vadd.f32 %v276, %v318
    %v327 = vadd.f32 %v281, %v318
    %v328 = vadd.f32 %v286, %v318
    %v329 = vadd.f32 %v291, %v318
    %v330 = vadd.f32 %v296, %v318
    %v331 = vadd.f32 %v301, %v318
    %v332 = vadd.f32 %v306, %v318
    %v333 = vadd.f32 %v311, %v318
    %v334 = vadd.f32 %v316, %v318
    %v335 = vmul.f32 %v173, 2.0
    %v336 = vmul.f32 %v176, 2.0
    %v337 = vmul.f32 %v179, 2.0
    %v338 = vmul.f32 %v182, 2.0
    %v339 = vmul.f32 %v185, 2.0
    %v340 = vmul.f32 %v188, 2.0
    %v341 = vmul.f32 %v191, 2.0
    %v342 = vmul.f32 %v194, 2.0
    %v343 = vmul.f32 %v197, 2.0
    %v344 = vmul.f32 %v200, 2.0
    %v345 = vmul.f32 %v203, 2.0
    %v346 = vmul.f32 %v206, 2.0
    %v347 = vmul.f32 %v209, 2.0
    %v348 = vmul.f32 %v212, 2.0
    %v349 = vmul.f32 %v215, 2.0
    %v350 = vmul.f32 %v218, 2.0
    %v351 = vsub.f32 %v319, %v335
    %v352 = vsub.f32 %v320, %v336
    %v353 = vsub.f32 %v321, %v337
    %v354 = vsub.f32 %v322, %v338
    %v355 = vsub.f32 %v323, %v339
    %v356 = vsub.f32 %v324, %v340
    %v357 = vsub.f32 %v325, %v341
    %v358 = vsub.f32 %v326, %v342
    %v359 = vsub.f32 %v327, %v343
    %v360 = vsub.f32 %v328, %v344
    %v361 = vsub.f32 %v329, %v345
    %v362 = vsub.f32 %v330, %v346
    %v363 = vsub.f32 %v331, %v347
    %v364 = vsub.f32 %v332, %v348
    %v365 = vsub.f32 %v333, %v349
    %v366 = vsub.f32 %v334, %v350
    %v367 = vmax.f32 %v351, 0.0
    %v368 = vmax.f32 %v352, 0.0
    %v369 = vmax.f32 %v353, 0.0
    %v370 = vmax.f32 %v354, 0.0
    %v371 = vmax.f32 %v355, 0.0
    %v372 = vmax.f32 %v356, 0.0
    %v373 = vmax.f32 %v357, 0.0
    %v374 = vmax.f32 %v358, 0.0
    %v375 = vmax.f32 %v359, 0.0
    %v376 = vmax.f32 %v360, 0.0
    %v377 = vmax.f32 %v361, 0.0
    %v378 = vmax.f32 %v362, 0.0
    %v379 = vmax.f32 %v363, 0.0
    %v380 = vmax.f32 %v364, 0.0
    %v381 = vmax.f32 %v365, 0.0
    %v382 = vmax.f32 %v366, 0.0
    %s383 = sld [smem:[#allocation5 + $0x4]]
    %v384 = vstv %s383
    %v385 = vmul.f32 %v367, %v384
    %v386 = vmul.f32 %v368, %v384
    %v387 = vmul.f32 %v369, %v384
    %v388 = vmul.f32 %v370, %v384
    %v389 = vmul.f32 %v371, %v384
    %v390 = vmul.f32 %v372, %v384
    %v391 = vmul.f32 %v373, %v384
    %v392 = vmul.f32 %v374, %v384
    %v393 = vmul.f32 %v375, %v384
    %v394 = vmul.f32 %v376, %v384
    %v395 = vmul.f32 %v377, %v384
    %v396 = vmul.f32 %v378, %v384
    %v397 = vmul.f32 %v379, %v384
    %v398 = vmul.f32 %v380, %v384
    %v399 = vmul.f32 %v381, %v384
    %v400 = vmul.f32 %v382, %v384
    %v401 = vmul.f32 %v385, 1.442695
    %v402 = vpow.pop %v401
    %v403 = vmul.f32 %v386, 1.442695
    %v404 = vpow.pop %v403
    %v405 = vmul.f32 %v387, 1.442695
    %v406 = vpow.pop %v405
    %v407 = vmul.f32 %v388, 1.442695
    %v408 = vpow.pop %v407
    %v409 = vmul.f32 %v389, 1.442695
    %v410 = vpow.pop %v409
    %v411 = vmul.f32 %v390, 1.442695
    %v412 = vpow.pop %v411
    %v413 = vmul.f32 %v391, 1.442695
    %v414 = vpow.pop %v413
    %v415 = vmul.f32 %v392, 1.442695
    %v416 = vpow.pop %v415
    %v417 = vmul.f32 %v393, 1.442695
    %v418 = vpow.pop %v417
    %v419 = vmul.f32 %v394, 1.442695
    %v420 = vpow.pop %v419
    %v421 = vmul.f32 %v395, 1.442695
    %v422 = vpow.pop %v421
    %v423 = vmul.f32 %v396, 1.442695
    %v424 = vpow.pop %v423
    %v425 = vmul.f32 %v397, 1.442695
    %v426 = vpow.pop %v425
    %v427 = vmul.f32 %v398, 1.442695
    %v428 = vpow.pop %v427
    %v429 = vmul.f32 %v399, 1.442695
    %v430 = vpow.pop %v429
    %v431 = vmul.f32 %v400, 1.442695
    %v432 = vpow.pop %v431
    %v433 = vmul.f32 %v402, %v402
    %v434 = vmul.f32 %v404, %v404
    %v435 = vmul.f32 %v406, %v406
    %v436 = vmul.f32 %v408, %v408
    %v437 = vmul.f32 %v410, %v410
    %v438 = vmul.f32 %v412, %v412
    %v439 = vmul.f32 %v414, %v414
    %v440 = vmul.f32 %v416, %v416
    %v441 = vmul.f32 %v418, %v418
    %v442 = vmul.f32 %v420, %v420
    %v443 = vmul.f32 %v422, %v422
    %v444 = vmul.f32 %v424, %v424
    %v445 = vmul.f32 %v426, %v426
    %v446 = vmul.f32 %v428, %v428
    %v447 = vmul.f32 %v430, %v430
    %v448 = vmul.f32 %v432, %v432
    %v449 = vadd.f32 %v402, %v433
    %v450 = vadd.f32 %v404, %v434
    %v451 = vadd.f32 %v406, %v435
    %v452 = vadd.f32 %v408, %v436
    %v453 = vadd.f32 %v410, %v437
    %v454 = vadd.f32 %v412, %v438
    %v455 = vadd.f32 %v414, %v439
    %v456 = vadd.f32 %v416, %v440
    %v457 = vadd.f32 %v418, %v441
    %v458 = vadd.f32 %v420, %v442
    %v459 = vadd.f32 %v422, %v443
    %v460 = vadd.f32 %v424, %v444
    %v461 = vadd.f32 %v426, %v445
    %v462 = vadd.f32 %v428, %v446
    %v463 = vadd.f32 %v430, %v447
    %v464 = vadd.f32 %v432, %v448
    %v465 = vmul.f32 %v433, %v433
    %v466 = vmul.f32 %v434, %v434
    %v467 = vmul.f32 %v435, %v435
    %v468 = vmul.f32 %v436, %v436
    %v469 = vmul.f32 %v437, %v437
    %v470 = vmul.f32 %v438, %v438
    %v471 = vmul.f32 %v439, %v439
    %v472 = vmul.f32 %v440, %v440
    %v473 = vmul.f32 %v441, %v441
    %v474 = vmul.f32 %v442, %v442
    %v475 = vmul.f32 %v443, %v443
    %v476 = vmul.f32 %v444, %v444
    %v477 = vmul.f32 %v445, %v445
    %v478 = vmul.f32 %v446, %v446
    %v479 = vmul.f32 %v447, %v447
    %v480 = vmul.f32 %v448, %v448
    %v481 = vadd.f32 %v449, %v465
    %v482 = vadd.f32 %v450, %v466
    %v483 = vadd.f32 %v451, %v467
    %v484 = vadd.f32 %v452, %v468
    %v485 = vadd.f32 %v453, %v469
    %v486 = vadd.f32 %v454, %v470
    %v487 = vadd.f32 %v455, %v471
    %v488 = vadd.f32 %v456, %v472
    %v489 = vadd.f32 %v457, %v473
    %v490 = vadd.f32 %v458, %v474
    %v491 = vadd.f32 %v459, %v475
    %v492 = vadd.f32 %v460, %v476
    %v493 = vadd.f32 %v461, %v477
    %v494 = vadd.f32 %v462, %v478
    %v495 = vadd.f32 %v463, %v479
    %v496 = vadd.f32 %v464, %v480
    %v497 = vmul.f32 %v465, %v465
    %v498 = vmul.f32 %v466, %v466
    %v499 = vmul.f32 %v467, %v467
    %v500 = vmul.f32 %v468, %v468
    %v501 = vmul.f32 %v469, %v469
    %v502 = vmul.f32 %v470, %v470
    %v503 = vmul.f32 %v471, %v471
    %v504 = vmul.f32 %v472, %v472
    %v505 = vmul.f32 %v473, %v473
    %v506 = vmul.f32 %v474, %v474
    %v507 = vmul.f32 %v475, %v475
    %v508 = vmul.f32 %v476, %v476
    %v509 = vmul.f32 %v477, %v477
    %v510 = vmul.f32 %v478, %v478
    %v511 = vmul.f32 %v479, %v479
    %v512 = vmul.f32 %v480, %v480
    %v513 = vadd.f32 %v481, %v497
    %v514 = vadd.f32 %v482, %v498
    %v515 = vadd.f32 %v483, %v499
    %v516 = vadd.f32 %v484, %v500
    %v517 = vadd.f32 %v485, %v501
    %v518 = vadd.f32 %v486, %v502
    %v519 = vadd.f32 %v487, %v503
    %v520 = vadd.f32 %v488, %v504
    %v521 = vadd.f32 %v489, %v505
    %v522 = vadd.f32 %v490, %v506
    %v523 = vadd.f32 %v491, %v507
    %v524 = vadd.f32 %v492, %v508
    %v525 = vadd.f32 %v493, %v509
    %v526 = vadd.f32 %v494, %v510
    %v527 = vadd.f32 %v495, %v511
    %v528 = vadd.f32 %v496, %v512
    %v529 = vmul.f32 %v497, %v497
    %v530 = vmul.f32 %v498, %v498
    %v531 = vmul.f32 %v499, %v499
    %v532 = vmul.f32 %v500, %v500
    %v533 = vmul.f32 %v501, %v501
    %v534 = vmul.f32 %v502, %v502
    %v535 = vmul.f32 %v503, %v503
    %v536 = vmul.f32 %v504, %v504
    %v537 = vmul.f32 %v505, %v505
    %v538 = vmul.f32 %v506, %v506
    %v539 = vmul.f32 %v507, %v507
    %v540 = vmul.f32 %v508, %v508
    %v541 = vmul.f32 %v509, %v509
    %v542 = vmul.f32 %v510, %v510
    %v543 = vmul.f32 %v511, %v511
    %v544 = vmul.f32 %v512, %v512
    %v545 = vadd.f32 %v513, %v529
    %v546 = vadd.f32 %v514, %v530
    %v547 = vadd.f32 %v515, %v531
    %v548 = vadd.f32 %v516, %v532
    %v549 = vadd.f32 %v517, %v533
    %v550 = vadd.f32 %v518, %v534
    %v551 = vadd.f32 %v519, %v535
    %v552 = vadd.f32 %v520, %v536
    %v553 = vadd.f32 %v521, %v537
    %v554 = vadd.f32 %v522, %v538
    %v555 = vadd.f32 %v523, %v539
    %v556 = vadd.f32 %v524, %v540
    %v557 = vadd.f32 %v525, %v541
    %v558 = vadd.f32 %v526, %v542
    %v559 = vadd.f32 %v527, %v543
    %v560 = vadd.f32 %v528, %v544
    %p561 = scmp.eq.s32.totalorder %s121, %s122
    %s562 = scalar_select %p561, 1, 0
    %s563 = scvt.s32.f32 %s562
    %s564 = ssub.f32 2.0, %s563
    %v565 = vperm.slane %v237, 0
    %v566 = vmul.f32 %v545, %v565
    %v567 = vmul.f32 %v546, %v565
    %v568 = vmul.f32 %v547, %v565
    %v569 = vmul.f32 %v548, %v565
    %v570 = vmul.f32 %v549, %v565
    %v571 = vmul.f32 %v550, %v565
    %v572 = vmul.f32 %v551, %v565
    %v573 = vmul.f32 %v552, %v565
    %v574 = vmul.f32 %v553, %v565
    %v575 = vmul.f32 %v554, %v565
    %v576 = vmul.f32 %v555, %v565
    %v577 = vmul.f32 %v556, %v565
    %v578 = vmul.f32 %v557, %v565
    %v579 = vmul.f32 %v558, %v565
    %v580 = vmul.f32 %v559, %v565
    %v581 = vmul.f32 %v560, %v565
    %v582 = vstv %s564
    %v583 = vmul.f32 %v220, %v582
    %v584 = vmul.f32 %v221, %v582
    %v585 = vmul.f32 %v222, %v582
    %v586 = vmul.f32 %v223, %v582
    %v587 = vmul.f32 %v224, %v582
    %v588 = vmul.f32 %v225, %v582
    %v589 = vmul.f32 %v226, %v582
    %v590 = vmul.f32 %v227, %v582
    %v591 = vmul.f32 %v228, %v582
    %v592 = vmul.f32 %v229, %v582
    %v593 = vmul.f32 %v230, %v582
    %v594 = vmul.f32 %v231, %v582
    %v595 = vmul.f32 %v232, %v582
    %v596 = vmul.f32 %v233, %v582
    %v597 = vmul.f32 %v234, %v582
    %v598 = vmul.f32 %v235, %v582
    %600 = vset.pattern.permute.xlu0 1
    %601 = vperm.xlu0 %600, %v583
    %v602 = vpop.permute.xlu0 %601
    %605 = vset.pattern.permute.xlu0 1
    %606 = vperm.xlu0 %605, %v584
    %v607 = vpop.permute.xlu0 %606
    %610 = vset.pattern.permute.xlu0 1
    %611 = vperm.xlu0 %610, %v585
    %v612 = vpop.permute.xlu0 %611
    %615 = vset.pattern.permute.xlu0 1
    %616 = vperm.xlu0 %615, %v586
    %v617 = vpop.permute.xlu0 %616
    %620 = vset.pattern.permute.xlu0 1
    %621 = vperm.xlu0 %620, %v587
    %v622 = vpop.permute.xlu0 %621
    %625 = vset.pattern.permute.xlu0 1
    %626 = vperm.xlu0 %625, %v588
    %v627 = vpop.permute.xlu0 %626
    %630 = vset.pattern.permute.xlu0 1
    %631 = vperm.xlu0 %630, %v589
    %v632 = vpop.permute.xlu0 %631
    %635 = vset.pattern.permute.xlu0 1
    %636 = vperm.xlu0 %635, %v590
    %v637 = vpop.permute.xlu0 %636
    %640 = vset.pattern.permute.xlu0 1
    %641 = vperm.xlu0 %640, %v591
    %v642 = vpop.permute.xlu0 %641
    %645 = vset.pattern.permute.xlu0 1
    %646 = vperm.xlu0 %645, %v592
    %v647 = vpop.permute.xlu0 %646
    %650 = vset.pattern.permute.xlu0 1
    %651 = vperm.xlu0 %650, %v593
    %v652 = vpop.permute.xlu0 %651
    %655 = vset.pattern.permute.xlu0 1
    %656 = vperm.xlu0 %655, %v594
    %v657 = vpop.permute.xlu0 %656
    %660 = vset.pattern.permute.xlu0 1
    %661 = vperm.xlu0 %660, %v595
    %v662 = vpop.permute.xlu0 %661
    %665 = vset.pattern.permute.xlu0 1
    %666 = vperm.xlu0 %665, %v596
    %v667 = vpop.permute.xlu0 %666
    %670 = vset.pattern.permute.xlu0 1
    %671 = vperm.xlu0 %670, %v597
    %v672 = vpop.permute.xlu0 %671
    %675 = vset.pattern.permute.xlu0 1
    %676 = vperm.xlu0 %675, %v598
    %v677 = vpop.permute.xlu0 %676
    %v679 = vmul.f32 %v566, %v602
    %v680 = vmul.f32 %v567, %v607
    %v681 = vmul.f32 %v568, %v612
    %v682 = vmul.f32 %v569, %v617
    %v683 = vmul.f32 %v570, %v622
    %v684 = vmul.f32 %v571, %v627
    %v685 = vmul.f32 %v572, %v632
    %v686 = vmul.f32 %v573, %v637
    %v687 = vmul.f32 %v574, %v642
    %v688 = vmul.f32 %v575, %v647
    %v689 = vmul.f32 %v576, %v652
    %v690 = vmul.f32 %v577, %v657
    %v691 = vmul.f32 %v578, %v662
    %v692 = vmul.f32 %v579, %v667
    %v693 = vmul.f32 %v580, %v672
    %v694 = vmul.f32 %v581, %v677
    %v695 = vadd.f32 %v679, %v680
    %v696 = vadd.f32 %v695, %v681
    %v697 = vadd.f32 %v696, %v682
    %v698 = vadd.f32 %v697, %v683
    %v699 = vadd.f32 %v698, %v684
    %v700 = vadd.f32 %v699, %v685
    %v701 = vadd.f32 %v700, %v686
    %v702 = vadd.f32 %v701, %v687
    %v703 = vadd.f32 %v702, %v688
    %v704 = vadd.f32 %v703, %v689
    %v705 = vadd.f32 %v704, %v690
    %v706 = vadd.f32 %v705, %v691
    %v707 = vadd.f32 %v706, %v692
    %v708 = vadd.f32 %v707, %v693
    %v709 = vadd.f32 %v708, %v694
    %710 = vst [vmem:[#allocation10] sm:$0xff] %v709
    // Predicated region
    $region30: #{tpu_custom_call.1} parent=1 // pred_check
      _
    $region31: #{tpu_custom_call.1} parent=1 // pred_check_branch
      %712 = sbr.rel (0) target = $region33
    $region32: #{tpu_custom_call.1} parent=1 // pred_region
      %714 = vsyncadd [#allocation7], 0
      %s716 = sshll.u32 [#allocation10], 4
      %s717 = int_to_ptr.vmem [resolvable:$true] %s716
      %s718 = sshll.u32 %s7, 4
      %s719 = int_to_ptr.hbm [resolvable:$true] %s718
      %721 = dma.vmem_to_hbm [thread:$0]  %s717, 128, %s719, [#allocation7]
    $region33: #{tpu_custom_call.1} parent=1 // pred_fallthru
      _
    // Predicated region
    $region34: #{tpu_custom_call.1} parent=1 // pred_check
      _
    $region35: #{tpu_custom_call.1} parent=1 // pred_check_branch
      %723 = sbr.rel (0) target = $region37
    $region36: #{tpu_custom_call.1} parent=1 // pred_region
      %725 = dma.done [#allocation7], 128
    $region37: #{tpu_custom_call.1} parent=1 // pred_fallthru
      _
    %726 = vsyncpa [#allocation6], 1
    %727 = vsyncpa [#allocation7], 1
    %728 = vsyncpa [#allocation8], 1

</llo_original>
